<compile_context>
chip_gen: v7x
topology: tpu7x:2x2x1
jax: 0.10.0
libtpu: 0.0.40
codegen_flags: <defaults>
</compile_context>

<pallas_src>
import functools

import numpy as np

import jax
import jax.numpy as jnp
from jax.experimental import pallas as pl
from jax.experimental.pallas import tpu as pltpu


def _round_up(x, m):
    return (x + m - 1) // m * m


def _single_tensorcore_chip():
    # Fold batch into lanes on single-TC chips (v2..v6); keep the per-sample
    # "parallel" grid on dual-TC v7x.  Detection failure -> fold (safe either way).
    try:
        kind = jax.devices()[0].device_kind.lower()
    except Exception:
        return True
    return "v7" not in kind


def _tap_masks(H, W, B, KH, KW):
    """Zero-padding boundary masks per tap, over L = B*H*W lanes.

    Lane layout: lane = s*H*W + h*W + w (sample-major).  The row/col masks
    simultaneously kill end-of-array roll wrap AND cross-sample wrap.
    """
    HW = H * W
    L = B * HW
    lane = np.arange(L)
    row = (lane % HW) // W
    col = lane % W
    ph, pw = (KH - 1) // 2, (KW - 1) // 2
    masks = np.ones((KH * KW, 1, L), np.float32)
    for i in range(KH):
        for j in range(KW):
            di, dj = i - ph, j - pw
            m = np.ones(L, bool)
            if di > 0:
                m &= row < H - di
            if di < 0:
                m &= row >= -di
            if dj > 0:
                m &= col < W - dj
            if dj < 0:
                m &= col >= -dj
            masks[i * KW + j, 0, :] = m.astype(np.float32)
    return jnp.asarray(masks)


def _conv_block_kernel(x_ref, w1_ref, w2_ref, gamma_ref, beta_ref, mask_ref,
                       o_ref, *, H, W, KH, KW, B, eps):
    """Fused convBlock forward for B samples laid out along lanes.

    x_ref:     (C_in_p, L)            L = B*H*W, channels on sublanes
    w1_ref:    (C_out, KH*KW*C_in_p)  conv1 weights, (i, j, c) contraction order
    w2_ref:    (C_out, KH*KW*C_out)   conv2 weights
    gamma_ref, beta_ref: (C_out, 1)   shared InstanceNorm2d affine (one module)
    mask_ref:  (KH*KW, 1, L)          per-tap zero-padding masks (constant)
    o_ref:     (C_out, L)
    """
    HW = H * W
    L = B * HW
    ph = (KH - 1) // 2
    pw = (KW - 1) // 2
    C_out = o_ref.shape[0]

    gamma = gamma_ref[...]                      # (C_out, 1)
    beta = beta_ref[...]

    def conv_same(act, w_ref):
        # act: (C, L) f32.  Build the tap-stacked activation and do ONE matmul.
        taps = []
        for i in range(KH):
            for j in range(KW):
                off = (i - ph) * W + (j - pw)
                if off == 0:
                    shifted = act                               # center tap
                else:
                    # shifted[f] = act[f + off]; wrap killed by the mask.
                    shifted = pltpu.roll(act, (-off) % L, axis=1)
                    shifted = shifted * mask_ref[i * KW + j]    # (1, L) bcast
                taps.append(shifted)
        stacked = jnp.concatenate(taps, axis=0)                 # (KH*KW*C, L)
        # (C_out, KH*KW*C) x (KH*KW*C, L) -> (C_out, L): single MXU launch.
        return jnp.dot(w_ref[...], stacked, preferred_element_type=jnp.float32)

    def inorm_relu(acc):
        # acc: (C_out, L).  Per-sample InstanceNorm from raw moments with one
        # stacked lane-reduce; var = E[x^2] - mean^2 (review opt 4).
        segs = []
        stat_rows = []
        for s in range(B):
            seg = acc[:, s * HW:(s + 1) * HW]
            segs.append(seg)
            stat_rows.append(seg)
            stat_rows.append(seg * seg)
        stats = jnp.concatenate(stat_rows, axis=0)              # (2*B*C_out, HW)
        moms = jnp.sum(stats, axis=1, keepdims=True) * (1.0 / HW)
        outs = []
        for s in range(B):
            mean = moms[(2 * s) * C_out:(2 * s + 1) * C_out]    # (C_out, 1)
            ex2 = moms[(2 * s + 1) * C_out:(2 * s + 2) * C_out]
            var = ex2 - mean * mean
            y = (segs[s] - mean) * jax.lax.rsqrt(var + eps)
            y = y * gamma + beta
            outs.append(jnp.maximum(y, 0.0))                    # ReLU
        return outs[0] if B == 1 else jnp.concatenate(outs, axis=1)

    act0 = x_ref[...].astype(jnp.float32)                       # (C_in_p, L)
    a1 = inorm_relu(conv_same(act0, w1_ref))                    # stays in VMEM/vregs
    a2 = inorm_relu(conv_same(a1, w2_ref))                      # (C_out, L)
    o_ref[...] = a2.astype(o_ref.dtype)


def conv_block_forward(x_nchw, params, *, padding, eps=1e-5, fold_batch=None):
    """convBlock forward.  x_nchw: (N, C_in, H, W), PyTorch layout.

    params: w1 (C_out, C_in, KH, KW), w2 (C_out, C_out, KH, KW) in PyTorch OIHW;
            gamma/beta (C_out,) -- the SINGLE shared InstanceNorm2d affine
            (the module applies the same self.INorm after both convs).
    """
    N, C_in, H, W = x_nchw.shape
    w1 = jnp.asarray(params["w1"])
    w2 = jnp.asarray(params["w2"])
    C_out, _, KH, KW = w1.shape
    if KH - 1 != 2 * padding or KW - 1 != 2 * padding:
        # TODO(synk): only 'same' padding ((k-1)//2) is implemented; the UNet
        # convBlock uses kernel_size=3, padding=1 which satisfies this.
        raise NotImplementedError("only same-padding convBlock is supported")

    if fold_batch is None:
        fold_batch = _single_tensorcore_chip()
    B = N if fold_batch else 1

    HW = H * W
    L = B * HW

    # Sublane-align stage-1 channels so every stacked tap piece is 8-aligned.
    C_in_p = _round_up(C_in, 8)

    # (N, C_in, H, W) -> (C_in_p, N*HW): channels on sublanes, flat
    # (sample, row, col) on lanes -> lane-dense activations and stores.
    x2d = jnp.transpose(x_nchw, (1, 0, 2, 3)).reshape(C_in, N * HW)
    if C_in_p != C_in:
        x2d = jnp.pad(x2d, ((0, C_in_p - C_in), (0, 0)))

    def _flatten_w(w, cp):
        # OIHW -> (O, KH*KW*cp) with (i, j, c) contraction order (matches taps).
        c = w.shape[1]
        w = jnp.transpose(w, (0, 2, 3, 1))                      # (O, KH, KW, I)
        if cp != c:
            w = jnp.pad(w, ((0, 0), (0, 0), (0, 0), (0, cp - c)))
        return w.reshape(w.shape[0], KH * KW * cp)

    w1_2d = _flatten_w(w1, C_in_p).astype(jnp.float32)          # (C_out, 9*C_in_p)
    w2_2d = _flatten_w(w2, C_out).astype(jnp.float32)           # (C_out, 9*C_out)
    gamma2d = jnp.asarray(params["gamma"]).reshape(C_out, 1).astype(jnp.float32)
    beta2d = jnp.asarray(params["beta"]).reshape(C_out, 1).astype(jnp.float32)
    masks = _tap_masks(H, W, B, KH, KW)                         # (KH*KW, 1, L)

    kernel = functools.partial(
        _conv_block_kernel, H=H, W=W, KH=KH, KW=KW, B=B, eps=eps)

    out2d = pl.pallas_call(
        kernel,
        out_shape=jax.ShapeDtypeStruct((C_out, N * HW), x_nchw.dtype),
        grid=(N // B,),
        in_specs=[
            pl.BlockSpec((C_in_p, L), lambda n: (0, n)),
            pl.BlockSpec((C_out, KH * KW * C_in_p), lambda n: (0, 0)),
            pl.BlockSpec((C_out, KH * KW * C_out), lambda n: (0, 0)),
            pl.BlockSpec((C_out, 1), lambda n: (0, 0)),
            pl.BlockSpec((C_out, 1), lambda n: (0, 0)),
            pl.BlockSpec((KH * KW, 1, L), lambda n: (0, 0, 0)),
        ],
        out_specs=pl.BlockSpec((C_out, L), lambda n: (0, n)),
        compiler_params=pltpu.CompilerParams(
            dimension_semantics=("parallel",)),
    )(x2d, w1_2d, w2_2d, gamma2d, beta2d, masks)

    return jnp.transpose(out2d.reshape(C_out, N, H, W), (1, 0, 2, 3))


# ---------------- pure-JAX reference (for correctness check) ----------------
def _ref_stage(x_nchw, w_oihw, gamma, beta, padding, eps=1e-5):
    y = jax.lax.conv_general_dilated(
        x_nchw, w_oihw, window_strides=(1, 1),
        padding=[(padding, padding), (padding, padding)],
        dimension_numbers=("NCHW", "OIHW", "NCHW"))
    mean = jnp.mean(y, axis=(2, 3), keepdims=True)
    var = jnp.mean((y - mean) ** 2, axis=(2, 3), keepdims=True)
    y = (y - mean) * jax.lax.rsqrt(var + eps)
    y = y * gamma.reshape(1, -1, 1, 1) + beta.reshape(1, -1, 1, 1)
    return jnp.maximum(y, 0.0)


def _ref_forward(x_nchw, w1_oihw, w2_oihw, gamma, beta, padding):
    y = _ref_stage(x_nchw, w1_oihw, gamma, beta, padding)
    y = _ref_stage(y, w2_oihw, gamma, beta, padding)
    return y


if __name__ == "__main__":
    # Shapes consistent with the module: batch=2, in_ch=4, out_ch=8,
    # spatial=16x16, kernel_size=3, padding=1 (the 'same' configuration).
    N, C_in, C_out, H, W, K, PAD = 2, 4, 8, 16, 16, 3, 1

    key = jax.random.PRNGKey(0)
    kx, kw1, kw2 = jax.random.split(key, 3)

    x = jax.random.normal(kx, (N, C_in, H, W), dtype=jnp.float32)
    w1 = 0.1 * jax.random.normal(kw1, (C_out, C_in, K, K), dtype=jnp.float32)
    w2 = 0.1 * jax.random.normal(kw2, (C_out, C_out, K, K), dtype=jnp.float32)
    gamma = jnp.ones((C_out,), dtype=jnp.float32)   # InstanceNorm2d affine init
    beta = jnp.zeros((C_out,), dtype=jnp.float32)

    params = {"w1": w1, "w2": w2, "gamma": gamma, "beta": beta}

    ref = _ref_forward(x, w1, w2, gamma, beta, PAD)

    # Exercise both layouts: batch folded into lanes (v5e/v6e path) and
    # per-sample grid (v7x path), then the auto-detected default.
    for fold in (True, False, None):
        out = conv_block_forward(x, params, padding=PAD, fold_batch=fold)
        out = jax.block_until_ready(out)
        assert out.shape == (N, C_out, H, W)
        assert jnp.allclose(out, ref, atol=1e-3, rtol=1e-3), \
            f"mismatch vs reference (fold_batch={fold})"

    print("KERNEL_OK")
</pallas_src>

<mosaic_0001>
module attributes {stable_mosaic.version = 11 : i64} {
  func.func @_conv_block_kernel(%arg0: i32, %arg1: memref<8x512xf32, #tpu.memory_space<vmem>>, %arg2: memref<8x72xf32, #tpu.memory_space<vmem>>, %arg3: memref<8x72xf32, #tpu.memory_space<vmem>>, %arg4: memref<8x1xf32, #tpu.memory_space<vmem>>, %arg5: memref<8x1xf32, #tpu.memory_space<vmem>>, %arg6: memref<9x1x512xf32, #tpu.memory_space<vmem>>, %arg7: memref<8x512xf32, #tpu.memory_space<vmem>>) attributes {dimension_semantics = [#tpu.dimension_semantics<parallel>], iteration_bounds = array<i64: 1>, scalar_prefetch = 0 : i64, scratch_operands = 0 : i64, tpu.core_type = #tpu.core_type<tc>, window_params = [{transform_indices = @transform_0, window_bounds = array<i64: 8, 512>}, {pipeline_mode = #tpu.pipeline_mode<synchronous>, transform_indices = @transform_1, window_bounds = array<i64: 8, 72>}, {pipeline_mode = #tpu.pipeline_mode<synchronous>, transform_indices = @transform_2, window_bounds = array<i64: 8, 72>}, {pipeline_mode = #tpu.pipeline_mode<synchronous>, transform_indices = @transform_3, window_bounds = array<i64: 8, 1>}, {pipeline_mode = #tpu.pipeline_mode<synchronous>, transform_indices = @transform_4, window_bounds = array<i64: 8, 1>}, {pipeline_mode = #tpu.pipeline_mode<synchronous>, transform_indices = @transform_5, window_bounds = array<i64: 9, 1, 512>}, {transform_indices = @transform_6, window_bounds = array<i64: 8, 512>}]} {
    %c0 = arith.constant 0 : index
    %c0_0 = arith.constant 0 : index
    %0 = vector.load %arg4[%c0, %c0_0] : memref<8x1xf32, #tpu.memory_space<vmem>>, vector<8x1xf32>
    %c0_1 = arith.constant 0 : index
    %c0_2 = arith.constant 0 : index
    %1 = vector.load %arg5[%c0_1, %c0_2] : memref<8x1xf32, #tpu.memory_space<vmem>>, vector<8x1xf32>
    %c0_3 = arith.constant 0 : index
    %c0_4 = arith.constant 0 : index
    %2 = vector.load %arg1[%c0_3, %c0_4] : memref<8x512xf32, #tpu.memory_space<vmem>>, vector<8x512xf32>
    %c17_i32 = arith.constant 17 : i32
    %3 = tpu.dynamic_rotate %2 by %c17_i32 dim 1 : vector<8x512xf32>, i32 -> vector<8x512xf32>
    %c0_5 = arith.constant 0 : index
    %c0_6 = arith.constant 0 : index
    %c0_7 = arith.constant 0 : index
    %4 = vector.load %arg6[%c0_5, %c0_6, %c0_7] : memref<9x1x512xf32, #tpu.memory_space<vmem>>, vector<1x1x512xf32>
    %5 = vector.shape_cast %4 : vector<1x1x512xf32> to vector<1x512xf32>
    %6 = vector.broadcast %5 : vector<1x512xf32> to vector<8x512xf32>
    %7 = arith.mulf %3, %6 : vector<8x512xf32>
    %c16_i32 = arith.constant 16 : i32
    %8 = tpu.dynamic_rotate %2 by %c16_i32 dim 1 : vector<8x512xf32>, i32 -> vector<8x512xf32>
    %c1 = arith.constant 1 : index
    %c0_8 = arith.constant 0 : index
    %c0_9 = arith.constant 0 : index
    %9 = vector.load %arg6[%c1, %c0_8, %c0_9] : memref<9x1x512xf32, #tpu.memory_space<vmem>>, vector<1x1x512xf32>
    %10 = vector.shape_cast %9 : vector<1x1x512xf32> to vector<1x512xf32>
    %11 = vector.broadcast %10 : vector<1x512xf32> to vector<8x512xf32>
    %12 = arith.mulf %8, %11 : vector<8x512xf32>
    %c15_i32 = arith.constant 15 : i32
    %13 = tpu.dynamic_rotate %2 by %c15_i32 dim 1 : vector<8x512xf32>, i32 -> vector<8x512xf32>
    %c2 = arith.constant 2 : index
    %c0_10 = arith.constant 0 : index
    %c0_11 = arith.constant 0 : index
    %14 = vector.load %arg6[%c2, %c0_10, %c0_11] : memref<9x1x512xf32, #tpu.memory_space<vmem>>, vector<1x1x512xf32>
    %15 = vector.shape_cast %14 : vector<1x1x512xf32> to vector<1x512xf32>
    %16 = vector.broadcast %15 : vector<1x512xf32> to vector<8x512xf32>
    %17 = arith.mulf %13, %16 : vector<8x512xf32>
    %c1_i32 = arith.constant 1 : i32
    %18 = tpu.dynamic_rotate %2 by %c1_i32 dim 1 : vector<8x512xf32>, i32 -> vector<8x512xf32>
    %c3 = arith.constant 3 : index
    %c0_12 = arith.constant 0 : index
    %c0_13 = arith.constant 0 : index
    %19 = vector.load %arg6[%c3, %c0_12, %c0_13] : memref<9x1x512xf32, #tpu.memory_space<vmem>>, vector<1x1x512xf32>
    %20 = vector.shape_cast %19 : vector<1x1x512xf32> to vector<1x512xf32>
    %21 = vector.broadcast %20 : vector<1x512xf32> to vector<8x512xf32>
    %22 = arith.mulf %18, %21 : vector<8x512xf32>
    %c511_i32 = arith.constant 511 : i32
    %23 = tpu.dynamic_rotate %2 by %c511_i32 dim 1 : vector<8x512xf32>, i32 -> vector<8x512xf32>
    %c5 = arith.constant 5 : index
    %c0_14 = arith.constant 0 : index
    %c0_15 = arith.constant 0 : index
    %24 = vector.load %arg6[%c5, %c0_14, %c0_15] : memref<9x1x512xf32, #tpu.memory_space<vmem>>, vector<1x1x512xf32>
    %25 = vector.shape_cast %24 : vector<1x1x512xf32> to vector<1x512xf32>
    %26 = vector.broadcast %25 : vector<1x512xf32> to vector<8x512xf32>
    %27 = arith.mulf %23, %26 : vector<8x512xf32>
    %c497_i32 = arith.constant 497 : i32
    %28 = tpu.dynamic_rotate %2 by %c497_i32 dim 1 : vector<8x512xf32>, i32 -> vector<8x512xf32>
    %c6 = arith.constant 6 : index
    %c0_16 = arith.constant 0 : index
    %c0_17 = arith.constant 0 : index
    %29 = vector.load %arg6[%c6, %c0_16, %c0_17] : memref<9x1x512xf32, #tpu.memory_space<vmem>>, vector<1x1x512xf32>
    %30 = vector.shape_cast %29 : vector<1x1x512xf32> to vector<1x512xf32>
    %31 = vector.broadcast %30 : vector<1x512xf32> to vector<8x512xf32>
    %32 = arith.mulf %28, %31 : vector<8x512xf32>
    %c496_i32 = arith.constant 496 : i32
    %33 = tpu.dynamic_rotate %2 by %c496_i32 dim 1 : vector<8x512xf32>, i32 -> vector<8x512xf32>
    %c7 = arith.constant 7 : index
    %c0_18 = arith.constant 0 : index
    %c0_19 = arith.constant 0 : index
    %34 = vector.load %arg6[%c7, %c0_18, %c0_19] : memref<9x1x512xf32, #tpu.memory_space<vmem>>, vector<1x1x512xf32>
    %35 = vector.shape_cast %34 : vector<1x1x512xf32> to vector<1x512xf32>
    %36 = vector.broadcast %35 : vector<1x512xf32> to vector<8x512xf32>
    %37 = arith.mulf %33, %36 : vector<8x512xf32>
    %c495_i32 = arith.constant 495 : i32
    %38 = tpu.dynamic_rotate %2 by %c495_i32 dim 1 : vector<8x512xf32>, i32 -> vector<8x512xf32>
    %c8 = arith.constant 8 : index
    %c0_20 = arith.constant 0 : index
    %c0_21 = arith.constant 0 : index
    %39 = vector.load %arg6[%c8, %c0_20, %c0_21] : memref<9x1x512xf32, #tpu.memory_space<vmem>>, vector<1x1x512xf32>
    %40 = vector.shape_cast %39 : vector<1x1x512xf32> to vector<1x512xf32>
    %41 = vector.broadcast %40 : vector<1x512xf32> to vector<8x512xf32>
    %42 = arith.mulf %38, %41 : vector<8x512xf32>
    %43 = tpu.concatenate %7, %12, %17, %22, %2, %27, %32, %37, %42 in 0 : vector<8x512xf32>, vector<8x512xf32>, vector<8x512xf32>, vector<8x512xf32>, vector<8x512xf32>, vector<8x512xf32>, vector<8x512xf32>, vector<8x512xf32>, vector<8x512xf32> -> vector<72x512xf32>
    %c0_22 = arith.constant 0 : index
    %c0_23 = arith.constant 0 : index
    %44 = vector.load %arg2[%c0_22, %c0_23] : memref<8x72xf32, #tpu.memory_space<vmem>>, vector<8x72xf32>
    %cst = arith.constant dense<0.000000e+00> : vector<8x512xf32>
    %45 = tpu.matmul %44, %43, %cst {dimension_numbers = #tpu.dot_dimension_numbers<[1], [0], [0], [1], [0, 0, 1, 1], [], []>} : vector<8x72xf32>, vector<72x512xf32>, vector<8x512xf32> -> vector<8x512xf32>
    %46 = vector.extract_strided_slice %45 {offsets = [0, 0], sizes = [8, 256], strides = [1, 1]} : vector<8x512xf32> to vector<8x256xf32>
    %47 = arith.mulf %46, %46 : vector<8x256xf32>
    %48 = vector.extract_strided_slice %45 {offsets = [0, 256], sizes = [8, 256], strides = [1, 1]} : vector<8x512xf32> to vector<8x256xf32>
    %49 = arith.mulf %48, %48 : vector<8x256xf32>
    %50 = tpu.concatenate %46, %47, %48, %49 in 0 : vector<8x256xf32>, vector<8x256xf32>, vector<8x256xf32>, vector<8x256xf32> -> vector<32x256xf32>
    %cst_24 = arith.constant dense<0.000000e+00> : vector<32xf32>
    %51 = vector.multi_reduction <add>, %50, %cst_24 [1] : vector<32x256xf32> to vector<32xf32>
    %52 = vector.shape_cast %51 : vector<32xf32> to vector<32x1xf32>
    %cst_25 = arith.constant 3.906250e-03 : f32
    %53 = vector.broadcast %cst_25 : f32 to vector<32x1xf32>
    %54 = arith.mulf %52, %53 : vector<32x1xf32>
    %55 = vector.extract_strided_slice %54 {offsets = [0, 0], sizes = [8, 1], strides = [1, 1]} : vector<32x1xf32> to vector<8x1xf32>
    %56 = vector.extract_strided_slice %54 {offsets = [8, 0], sizes = [8, 1], strides = [1, 1]} : vector<32x1xf32> to vector<8x1xf32>
    %57 = arith.mulf %55, %55 : vector<8x1xf32>
    %58 = arith.subf %56, %57 : vector<8x1xf32>
    %59 = vector.broadcast %55 : vector<8x1xf32> to vector<8x256xf32>
    %60 = arith.subf %46, %59 : vector<8x256xf32>
    %cst_26 = arith.constant 9.99999974E-6 : f32
    %61 = vector.broadcast %cst_26 : f32 to vector<8x1xf32>
    %62 = arith.addf %58, %61 : vector<8x1xf32>
    %63 = math.rsqrt %62 : vector<8x1xf32>
    %64 = vector.broadcast %63 : vector<8x1xf32> to vector<8x256xf32>
    %65 = arith.mulf %60, %64 : vector<8x256xf32>
    %66 = vector.broadcast %0 : vector<8x1xf32> to vector<8x256xf32>
    %67 = arith.mulf %65, %66 : vector<8x256xf32>
    %68 = vector.broadcast %1 : vector<8x1xf32> to vector<8x256xf32>
    %69 = arith.addf %67, %68 : vector<8x256xf32>
    %cst_27 = arith.constant 0.000000e+00 : f32
    %70 = vector.broadcast %cst_27 : f32 to vector<8x256xf32>
    %71 = arith.maximumf %69, %70 : vector<8x256xf32>
    %72 = vector.extract_strided_slice %54 {offsets = [16, 0], sizes = [8, 1], strides = [1, 1]} : vector<32x1xf32> to vector<8x1xf32>
    %73 = vector.extract_strided_slice %54 {offsets = [24, 0], sizes = [8, 1], strides = [1, 1]} : vector<32x1xf32> to vector<8x1xf32>
    %74 = arith.mulf %72, %72 : vector<8x1xf32>
    %75 = arith.subf %73, %74 : vector<8x1xf32>
    %76 = vector.broadcast %72 : vector<8x1xf32> to vector<8x256xf32>
    %77 = arith.subf %48, %76 : vector<8x256xf32>
    %cst_28 = arith.constant 9.99999974E-6 : f32
    %78 = vector.broadcast %cst_28 : f32 to vector<8x1xf32>
    %79 = arith.addf %75, %78 : vector<8x1xf32>
    %80 = math.rsqrt %79 : vector<8x1xf32>
    %81 = vector.broadcast %80 : vector<8x1xf32> to vector<8x256xf32>
    %82 = arith.mulf %77, %81 : vector<8x256xf32>
    %83 = vector.broadcast %0 : vector<8x1xf32> to vector<8x256xf32>
    %84 = arith.mulf %82, %83 : vector<8x256xf32>
    %85 = vector.broadcast %1 : vector<8x1xf32> to vector<8x256xf32>
    %86 = arith.addf %84, %85 : vector<8x256xf32>
    %cst_29 = arith.constant 0.000000e+00 : f32
    %87 = vector.broadcast %cst_29 : f32 to vector<8x256xf32>
    %88 = arith.maximumf %86, %87 : vector<8x256xf32>
    %89 = tpu.concatenate %71, %88 in 1 : vector<8x256xf32>, vector<8x256xf32> -> vector<8x512xf32>
    %c17_i32_30 = arith.constant 17 : i32
    %90 = tpu.dynamic_rotate %89 by %c17_i32_30 dim 1 : vector<8x512xf32>, i32 -> vector<8x512xf32>
    %c0_31 = arith.constant 0 : index
    %c0_32 = arith.constant 0 : index
    %c0_33 = arith.constant 0 : index
    %91 = vector.load %arg6[%c0_31, %c0_32, %c0_33] : memref<9x1x512xf32, #tpu.memory_space<vmem>>, vector<1x1x512xf32>
    %92 = vector.shape_cast %91 : vector<1x1x512xf32> to vector<1x512xf32>
    %93 = vector.broadcast %92 : vector<1x512xf32> to vector<8x512xf32>
    %94 = arith.mulf %90, %93 : vector<8x512xf32>
    %c16_i32_34 = arith.constant 16 : i32
    %95 = tpu.dynamic_rotate %89 by %c16_i32_34 dim 1 : vector<8x512xf32>, i32 -> vector<8x512xf32>
    %c1_35 = arith.constant 1 : index
    %c0_36 = arith.constant 0 : index
    %c0_37 = arith.constant 0 : index
    %96 = vector.load %arg6[%c1_35, %c0_36, %c0_37] : memref<9x1x512xf32, #tpu.memory_space<vmem>>, vector<1x1x512xf32>
    %97 = vector.shape_cast %96 : vector<1x1x512xf32> to vector<1x512xf32>
    %98 = vector.broadcast %97 : vector<1x512xf32> to vector<8x512xf32>
    %99 = arith.mulf %95, %98 : vector<8x512xf32>
    %c15_i32_38 = arith.constant 15 : i32
    %100 = tpu.dynamic_rotate %89 by %c15_i32_38 dim 1 : vector<8x512xf32>, i32 -> vector<8x512xf32>
    %c2_39 = arith.constant 2 : index
    %c0_40 = arith.constant 0 : index
    %c0_41 = arith.constant 0 : index
    %101 = vector.load %arg6[%c2_39, %c0_40, %c0_41] : memref<9x1x512xf32, #tpu.memory_space<vmem>>, vector<1x1x512xf32>
    %102 = vector.shape_cast %101 : vector<1x1x512xf32> to vector<1x512xf32>
    %103 = vector.broadcast %102 : vector<1x512xf32> to vector<8x512xf32>
    %104 = arith.mulf %100, %103 : vector<8x512xf32>
    %c1_i32_42 = arith.constant 1 : i32
    %105 = tpu.dynamic_rotate %89 by %c1_i32_42 dim 1 : vector<8x512xf32>, i32 -> vector<8x512xf32>
    %c3_43 = arith.constant 3 : index
    %c0_44 = arith.constant 0 : index
    %c0_45 = arith.constant 0 : index
    %106 = vector.load %arg6[%c3_43, %c0_44, %c0_45] : memref<9x1x512xf32, #tpu.memory_space<vmem>>, vector<1x1x512xf32>
    %107 = vector.shape_cast %106 : vector<1x1x512xf32> to vector<1x512xf32>
    %108 = vector.broadcast %107 : vector<1x512xf32> to vector<8x512xf32>
    %109 = arith.mulf %105, %108 : vector<8x512xf32>
    %c511_i32_46 = arith.constant 511 : i32
    %110 = tpu.dynamic_rotate %89 by %c511_i32_46 dim 1 : vector<8x512xf32>, i32 -> vector<8x512xf32>
    %c5_47 = arith.constant 5 : index
    %c0_48 = arith.constant 0 : index
    %c0_49 = arith.constant 0 : index
    %111 = vector.load %arg6[%c5_47, %c0_48, %c0_49] : memref<9x1x512xf32, #tpu.memory_space<vmem>>, vector<1x1x512xf32>
    %112 = vector.shape_cast %111 : vector<1x1x512xf32> to vector<1x512xf32>
    %113 = vector.broadcast %112 : vector<1x512xf32> to vector<8x512xf32>
    %114 = arith.mulf %110, %113 : vector<8x512xf32>
    %c497_i32_50 = arith.constant 497 : i32
    %115 = tpu.dynamic_rotate %89 by %c497_i32_50 dim 1 : vector<8x512xf32>, i32 -> vector<8x512xf32>
    %c6_51 = arith.constant 6 : index
    %c0_52 = arith.constant 0 : index
    %c0_53 = arith.constant 0 : index
    %116 = vector.load %arg6[%c6_51, %c0_52, %c0_53] : memref<9x1x512xf32, #tpu.memory_space<vmem>>, vector<1x1x512xf32>
    %117 = vector.shape_cast %116 : vector<1x1x512xf32> to vector<1x512xf32>
    %118 = vector.broadcast %117 : vector<1x512xf32> to vector<8x512xf32>
    %119 = arith.mulf %115, %118 : vector<8x512xf32>
    %c496_i32_54 = arith.constant 496 : i32
    %120 = tpu.dynamic_rotate %89 by %c496_i32_54 dim 1 : vector<8x512xf32>, i32 -> vector<8x512xf32>
    %c7_55 = arith.constant 7 : index
    %c0_56 = arith.constant 0 : index
    %c0_57 = arith.constant 0 : index
    %121 = vector.load %arg6[%c7_55, %c0_56, %c0_57] : memref<9x1x512xf32, #tpu.memory_space<vmem>>, vector<1x1x512xf32>
    %122 = vector.shape_cast %121 : vector<1x1x512xf32> to vector<1x512xf32>
    %123 = vector.broadcast %122 : vector<1x512xf32> to vector<8x512xf32>
    %124 = arith.mulf %120, %123 : vector<8x512xf32>
    %c495_i32_58 = arith.constant 495 : i32
    %125 = tpu.dynamic_rotate %89 by %c495_i32_58 dim 1 : vector<8x512xf32>, i32 -> vector<8x512xf32>
    %c8_59 = arith.constant 8 : index
    %c0_60 = arith.constant 0 : index
    %c0_61 = arith.constant 0 : index
    %126 = vector.load %arg6[%c8_59, %c0_60, %c0_61] : memref<9x1x512xf32, #tpu.memory_space<vmem>>, vector<1x1x512xf32>
    %127 = vector.shape_cast %126 : vector<1x1x512xf32> to vector<1x512xf32>
    %128 = vector.broadcast %127 : vector<1x512xf32> to vector<8x512xf32>
    %129 = arith.mulf %125, %128 : vector<8x512xf32>
    %130 = tpu.concatenate %94, %99, %104, %109, %89, %114, %119, %124, %129 in 0 : vector<8x512xf32>, vector<8x512xf32>, vector<8x512xf32>, vector<8x512xf32>, vector<8x512xf32>, vector<8x512xf32>, vector<8x512xf32>, vector<8x512xf32>, vector<8x512xf32> -> vector<72x512xf32>
    %c0_62 = arith.constant 0 : index
    %c0_63 = arith.constant 0 : index
    %131 = vector.load %arg3[%c0_62, %c0_63] : memref<8x72xf32, #tpu.memory_space<vmem>>, vector<8x72xf32>
    %cst_64 = arith.constant dense<0.000000e+00> : vector<8x512xf32>
    %132 = tpu.matmul %131, %130, %cst_64 {dimension_numbers = #tpu.dot_dimension_numbers<[1], [0], [0], [1], [0, 0, 1, 1], [], []>} : vector<8x72xf32>, vector<72x512xf32>, vector<8x512xf32> -> vector<8x512xf32>
    %133 = vector.extract_strided_slice %132 {offsets = [0, 0], sizes = [8, 256], strides = [1, 1]} : vector<8x512xf32> to vector<8x256xf32>
    %134 = arith.mulf %133, %133 : vector<8x256xf32>
    %135 = vector.extract_strided_slice %132 {offsets = [0, 256], sizes = [8, 256], strides = [1, 1]} : vector<8x512xf32> to vector<8x256xf32>
    %136 = arith.mulf %135, %135 : vector<8x256xf32>
    %137 = tpu.concatenate %133, %134, %135, %136 in 0 : vector<8x256xf32>, vector<8x256xf32>, vector<8x256xf32>, vector<8x256xf32> -> vector<32x256xf32>
    %cst_65 = arith.constant dense<0.000000e+00> : vector<32xf32>
    %138 = vector.multi_reduction <add>, %137, %cst_65 [1] : vector<32x256xf32> to vector<32xf32>
    %139 = vector.shape_cast %138 : vector<32xf32> to vector<32x1xf32>
    %cst_66 = arith.constant 3.906250e-03 : f32
    %140 = vector.broadcast %cst_66 : f32 to vector<32x1xf32>
    %141 = arith.mulf %139, %140 : vector<32x1xf32>
    %142 = vector.extract_strided_slice %141 {offsets = [0, 0], sizes = [8, 1], strides = [1, 1]} : vector<32x1xf32> to vector<8x1xf32>
    %143 = vector.extract_strided_slice %141 {offsets = [8, 0], sizes = [8, 1], strides = [1, 1]} : vector<32x1xf32> to vector<8x1xf32>
    %144 = arith.mulf %142, %142 : vector<8x1xf32>
    %145 = arith.subf %143, %144 : vector<8x1xf32>
    %146 = vector.broadcast %142 : vector<8x1xf32> to vector<8x256xf32>
    %147 = arith.subf %133, %146 : vector<8x256xf32>
    %cst_67 = arith.constant 9.99999974E-6 : f32
    %148 = vector.broadcast %cst_67 : f32 to vector<8x1xf32>
    %149 = arith.addf %145, %148 : vector<8x1xf32>
    %150 = math.rsqrt %149 : vector<8x1xf32>
    %151 = vector.broadcast %150 : vector<8x1xf32> to vector<8x256xf32>
    %152 = arith.mulf %147, %151 : vector<8x256xf32>
    %153 = vector.broadcast %0 : vector<8x1xf32> to vector<8x256xf32>
    %154 = arith.mulf %152, %153 : vector<8x256xf32>
    %155 = vector.broadcast %1 : vector<8x1xf32> to vector<8x256xf32>
    %156 = arith.addf %154, %155 : vector<8x256xf32>
    %cst_68 = arith.constant 0.000000e+00 : f32
    %157 = vector.broadcast %cst_68 : f32 to vector<8x256xf32>
    %158 = arith.maximumf %156, %157 : vector<8x256xf32>
    %159 = vector.extract_strided_slice %141 {offsets = [16, 0], sizes = [8, 1], strides = [1, 1]} : vector<32x1xf32> to vector<8x1xf32>
    %160 = vector.extract_strided_slice %141 {offsets = [24, 0], sizes = [8, 1], strides = [1, 1]} : vector<32x1xf32> to vector<8x1xf32>
    %161 = arith.mulf %159, %159 : vector<8x1xf32>
    %162 = arith.subf %160, %161 : vector<8x1xf32>
    %163 = vector.broadcast %159 : vector<8x1xf32> to vector<8x256xf32>
    %164 = arith.subf %135, %163 : vector<8x256xf32>
    %cst_69 = arith.constant 9.99999974E-6 : f32
    %165 = vector.broadcast %cst_69 : f32 to vector<8x1xf32>
    %166 = arith.addf %162, %165 : vector<8x1xf32>
    %167 = math.rsqrt %166 : vector<8x1xf32>
    %168 = vector.broadcast %167 : vector<8x1xf32> to vector<8x256xf32>
    %169 = arith.mulf %164, %168 : vector<8x256xf32>
    %170 = vector.broadcast %0 : vector<8x1xf32> to vector<8x256xf32>
    %171 = arith.mulf %169, %170 : vector<8x256xf32>
    %172 = vector.broadcast %1 : vector<8x1xf32> to vector<8x256xf32>
    %173 = arith.addf %171, %172 : vector<8x256xf32>
    %cst_70 = arith.constant 0.000000e+00 : f32
    %174 = vector.broadcast %cst_70 : f32 to vector<8x256xf32>
    %175 = arith.maximumf %173, %174 : vector<8x256xf32>
    %176 = tpu.concatenate %158, %175 in 1 : vector<8x256xf32>, vector<8x256xf32> -> vector<8x512xf32>
    %c0_71 = arith.constant 0 : index
    %c0_72 = arith.constant 0 : index
    %177 = vector.load %arg7[%c0_71, %c0_72] : memref<8x512xf32, #tpu.memory_space<vmem>>, vector<8x512xf32>
    tpu.vector_store %arg7[%c0_71, %c0_72], %176 {strides = array<i32>} : memref<8x512xf32, #tpu.memory_space<vmem>>, vector<8x512xf32>,
    return
  }
  func.func @transform_0(%arg0: i32) -> (i32, i32) {
    %c0_i32 = arith.constant 0 : i32
    %c0_i32_0 = arith.constant 0 : i32
    return %c0_i32, %arg0 : i32, i32
  }
  func.func @transform_1(%arg0: i32) -> (i32, i32) {
    %c0_i32 = arith.constant 0 : i32
    %c0_i32_0 = arith.constant 0 : i32
    %c0_i32_1 = arith.constant 0 : i32
    return %c0_i32, %c0_i32_0 : i32, i32
  }
  func.func @transform_2(%arg0: i32) -> (i32, i32) {
    %c0_i32 = arith.constant 0 : i32
    %c0_i32_0 = arith.constant 0 : i32
    %c0_i32_1 = arith.constant 0 : i32
    return %c0_i32, %c0_i32_0 : i32, i32
  }
  func.func @transform_3(%arg0: i32) -> (i32, i32) {
    %c0_i32 = arith.constant 0 : i32
    %c0_i32_0 = arith.constant 0 : i32
    %c0_i32_1 = arith.constant 0 : i32
    return %c0_i32, %c0_i32_0 : i32, i32
  }
  func.func @transform_4(%arg0: i32) -> (i32, i32) {
    %c0_i32 = arith.constant 0 : i32
    %c0_i32_0 = arith.constant 0 : i32
    %c0_i32_1 = arith.constant 0 : i32
    return %c0_i32, %c0_i32_0 : i32, i32
  }
  func.func @transform_5(%arg0: i32) -> (i32, i32, i32) {
    %c0_i32 = arith.constant 0 : i32
    %c0_i32_0 = arith.constant 0 : i32
    %c0_i32_1 = arith.constant 0 : i32
    %c0_i32_2 = arith.constant 0 : i32
    return %c0_i32, %c0_i32_0, %c0_i32_1 : i32, i32, i32
  }
  func.func @transform_6(%arg0: i32) -> (i32, i32) {
    %c0_i32 = arith.constant 0 : i32
    %c0_i32_0 = arith.constant 0 : i32
    return %c0_i32, %arg0 : i32, i32
  }
}

</mosaic_0001>

<llo_original>
// kernel: tpu_custom_call.1
$region0: #{tpu_custom_call.1}
  #allocation0 [shape = 'u32[]', space=smem, size = 0x4, offset = 0x4, fixed_abs, tag = 'smem constant byte address 0x4 - core index']
  #allocation1 [shape = 'u32[144,128]{1,0:T(1,128)}', space=vmem, size = 0x12000, scoped, tag = 'internal scratch']
  %s0 = inlined_call_operand.hbm [shape: f32[8,512], index: 0, kind: input, shape index: {}]
  %s1 = inlined_call_operand.hbm [shape: f32[8,72], index: 1, kind: input, shape index: {}]
  %s2 = inlined_call_operand.hbm [shape: f32[8,72], index: 2, kind: input, shape index: {}]
  %s3 = inlined_call_operand.vmem [shape: f32[8,1], index: 3, kind: input, shape index: {}]
  %s4 = inlined_call_operand.vmem [shape: f32[8,1], index: 4, kind: input, shape index: {}]
  %s5 = inlined_call_operand.vmem [shape: f32[9,1,512], index: 5, kind: input, shape index: {}]
  %s6 = inlined_call_operand.hbm [shape: f32[8,512], index: 6, kind: output, shape index: {}]
  %s7 = sld [smem:[#allocation0]]
  $region46: #{tpu_custom_call.1} parent=0
    _
  %s9 = ssub.s32 1, %s7
  %s10 = scalar_select 0, %s9, %s7
  $region1: #{tpu_custom_call.1} parent=0
    #allocation2 [shape = 'u8[16384]{0}', space=vmem, size = 0x4000, scoped, tag = 'input window, operand 0, single buffered']
    #allocation3 [shape = 's32[1]{0}', space=sflag, size = 0x4, scoped, tag = 'scoped memory for tpu_custom_call.1']
    #allocation4 [shape = 's32[1]{0}', space=sflag, size = 0x4, scoped, tag = 'scoped memory for tpu_custom_call.1']
    #allocation5 [shape = 'u8[4096]{0}', space=vmem, size = 0x1000, scoped, tag = 'input window, operand 1, single buffered']
    #allocation6 [shape = 's32[1]{0}', space=sflag, size = 0x4, scoped, tag = 'scoped memory for tpu_custom_call.1']
    #allocation7 [shape = 'u8[4096]{0}', space=vmem, size = 0x1000, scoped, tag = 'input window, operand 2, single buffered']
    #allocation8 [shape = 'u8[16384]{0}', space=vmem, size = 0x4000, scoped, tag = 'output window, operand 0, single buffered']
    %11 = vsyncpa [#allocation3], 0
    %12 = vsyncpa [#allocation6], 0
    %13 = vsyncpa [#allocation4], 0
    // Predicated region
    $region2: #{tpu_custom_call.1} parent=1 // pred_check
      _
    $region3: #{tpu_custom_call.1} parent=1 // pred_check_branch
      %15 = sbr.rel (0) target = $region5
    $region4: #{tpu_custom_call.1} parent=1 // pred_region
      %s17 = ssub.s32 512, 512
      %18 = vsyncadd [#allocation3], %s17
      %s20 = sshll.u32 [#allocation2], 4
      %s21 = int_to_ptr.vmem [resolvable:$true] %s20
      %23 = dma.hbm_to_vmem [thread:$0]  %s0, 512, %s21, [#allocation3]
    $region5: #{tpu_custom_call.1} parent=1 // pred_fallthru
      _
    // Predicated region
    $region6: #{tpu_custom_call.1} parent=1 // pred_check
      _
    $region7: #{tpu_custom_call.1} parent=1 // pred_check_branch
      %25 = sbr.rel (0) target = $region9
    $region8: #{tpu_custom_call.1} parent=1 // pred_region
      %s27 = ssub.s32 128, 128
      %28 = vsyncadd [#allocation6], %s27
      %s30 = sshll.u32 [#allocation5], 4
      %s31 = int_to_ptr.vmem [resolvable:$true] %s30
      %33 = dma.hbm_to_vmem [thread:$0]  %s1, 128, %s31, [#allocation6]
    $region9: #{tpu_custom_call.1} parent=1 // pred_fallthru
      _
    // Predicated region
    $region10: #{tpu_custom_call.1} parent=1 // pred_check
      _
    $region11: #{tpu_custom_call.1} parent=1 // pred_check_branch
      %35 = sbr.rel (0) target = $region13
    $region12: #{tpu_custom_call.1} parent=1 // pred_region
      %s37 = ssub.s32 128, 128
      %38 = vsyncadd [#allocation6], %s37
      %s40 = sshll.u32 [#allocation7], 4
      %s41 = int_to_ptr.vmem [resolvable:$true] %s40
      %43 = dma.hbm_to_vmem [thread:$0]  %s2, 128, %s41, [#allocation6]
    $region13: #{tpu_custom_call.1} parent=1 // pred_fallthru
      _
    // Predicated region
    $region14: #{tpu_custom_call.1} parent=1 // pred_check
      _
    $region15: #{tpu_custom_call.1} parent=1 // pred_check_branch
      %45 = sbr.rel (0) target = $region17
    $region16: #{tpu_custom_call.1} parent=1 // pred_region
      _
    $region17: #{tpu_custom_call.1} parent=1 // pred_fallthru
      _
    // Predicated region
    $region18: #{tpu_custom_call.1} parent=1 // pred_check
      _
    $region19: #{tpu_custom_call.1} parent=1 // pred_check_branch
      %47 = sbr.rel (0) target = $region21
    $region20: #{tpu_custom_call.1} parent=1 // pred_region
      _
    $region21: #{tpu_custom_call.1} parent=1 // pred_fallthru
      _
    // Predicated region
    $region22: #{tpu_custom_call.1} parent=1 // pred_check
      _
    $region23: #{tpu_custom_call.1} parent=1 // pred_check_branch
      %49 = sbr.rel (0) target = $region25
    $region24: #{tpu_custom_call.1} parent=1 // pred_region
      _
    $region25: #{tpu_custom_call.1} parent=1 // pred_fallthru
      _
    // Predicated region
    $region26: #{tpu_custom_call.1} parent=1 // pred_check
      _
    $region27: #{tpu_custom_call.1} parent=1 // pred_check_branch
      %51 = sbr.rel (0) target = $region29
    $region28: #{tpu_custom_call.1} parent=1 // pred_region
      %52 = dma.done [#allocation3], 512
    $region29: #{tpu_custom_call.1} parent=1 // pred_fallthru
      _
    // Predicated region
    $region30: #{tpu_custom_call.1} parent=1 // pred_check
      _
    $region31: #{tpu_custom_call.1} parent=1 // pred_check_branch
      %54 = sbr.rel (0) target = $region33
    $region32: #{tpu_custom_call.1} parent=1 // pred_region
      %55 = dma.done [#allocation6], 128
    $region33: #{tpu_custom_call.1} parent=1 // pred_fallthru
      _
    // Predicated region
    $region34: #{tpu_custom_call.1} parent=1 // pred_check
      _
    $region35: #{tpu_custom_call.1} parent=1 // pred_check_branch
      %57 = sbr.rel (0) target = $region37
    $region36: #{tpu_custom_call.1} parent=1 // pred_region
      %58 = dma.done [#allocation6], 128
    $region37: #{tpu_custom_call.1} parent=1 // pred_fallthru
      _
    %v59 = vld [vmem:[%s3] sm:$0xff]
    %v60 = vld [vmem:[%s4] sm:$0xff]
    %v61 = vld [vmem:[#allocation2] sm:$0xff]
    %v62 = vld [vmem:[#allocation2 + $0x8] sm:$0xff]
    %v63 = vld [vmem:[#allocation2 + $0x10] sm:$0xff]
    %v64 = vld [vmem:[#allocation2 + $0x18] sm:$0xff]
    %65 = vrot.lane.b32.xlu0 %v61, 17
    %v66 = vpop.permute.xlu0 %65
    %67 = vrot.lane.b32.xlu0 %v62, 17
    %v68 = vpop.permute.xlu0 %67
    %69 = vrot.lane.b32.xlu0 %v63, 17
    %v70 = vpop.permute.xlu0 %69
    %71 = vrot.lane.b32.xlu0 %v64, 17
    %v72 = vpop.permute.xlu0 %71
    %v73 = vlaneseq
    %v74 = vand.u32 %v73, 127
    %vm75 = vcmp.lt.s32.totalorder %v74, 17
    %v76 = vsel %vm75, %v70, %v72
    %v77 = vsel %vm75, %v68, %v70
    %v78 = vsel %vm75, %v66, %v68
    %v79 = vsel %vm75, %v72, %v66
    %v80 = vld [vmem:[%s5] sm:$0xf]
    %v82 = vlaneseq
    %v83 = vshrl.u32 %v82, 7
    %v84 = vsub.s32 0, %v83
    %v85 = vrot.slane %v80, %v84
    %v86 = vlaneseq
    %v87 = vshrl.u32 %v86, 7
    %v88 = vsub.s32 1, %v87
    %v89 = vrot.slane %v80, %v88
    %v90 = vlaneseq
    %v91 = vshrl.u32 %v90, 7
    %v92 = vsub.s32 2, %v91
    %v93 = vrot.slane %v80, %v92
    %v94 = vlaneseq
    %v95 = vshrl.u32 %v94, 7
    %v96 = vsub.s32 3, %v95
    %v97 = vrot.slane %v80, %v96
    %v102 = vmul.f32 %v79, %v85
    %v103 = vmul.f32 %v78, %v89
    %v104 = vmul.f32 %v77, %v93
    %v105 = vmul.f32 %v76, %v97
    %106 = vrot.lane.b32.xlu0 %v61, 16
    %v107 = vpop.permute.xlu0 %106
    %108 = vrot.lane.b32.xlu0 %v62, 16
    %v109 = vpop.permute.xlu0 %108
    %110 = vrot.lane.b32.xlu0 %v63, 16
    %v111 = vpop.permute.xlu0 %110
    %112 = vrot.lane.b32.xlu0 %v64, 16
    %v113 = vpop.permute.xlu0 %112
    %vm114 = vcmp.lt.s32.totalorder %v74, 16
    %v115 = vsel %vm114, %v111, %v113
    %v116 = vsel %vm114, %v109, %v111
    %v117 = vsel %vm114, %v107, %v109
    %v118 = vsel %vm114, %v113, %v107
    %s119 = scalar_lea.vmem %s5, 4
    %v120 = vld [vmem:[%s119] sm:$0xf]
    %v122 = vlaneseq
    %v123 = vshrl.u32 %v122, 7
    %v124 = vsub.s32 0, %v123
    %v125 = vrot.slane %v120, %v124
    %v126 = vlaneseq
    %v127 = vshrl.u32 %v126, 7
    %v128 = vsub.s32 1, %v127
    %v129 = vrot.slane %v120, %v128
    %v130 = vlaneseq
    %v131 = vshrl.u32 %v130, 7
    %v132 = vsub.s32 2, %v131
    %v133 = vrot.slane %v120, %v132
    %v134 = vlaneseq
    %v135 = vshrl.u32 %v134, 7
    %v136 = vsub.s32 3, %v135
    %v137 = vrot.slane %v120, %v136
    %v142 = vmul.f32 %v118, %v125
    %v143 = vmul.f32 %v117, %v129
    %v144 = vmul.f32 %v116, %v133
    %v145 = vmul.f32 %v115, %v137
    %146 = vrot.lane.b32.xlu0 %v61, 15
    %v147 = vpop.permute.xlu0 %146
    %148 = vrot.lane.b32.xlu0 %v62, 15
    %v149 = vpop.permute.xlu0 %148
    %150 = vrot.lane.b32.xlu0 %v63, 15
    %v151 = vpop.permute.xlu0 %150
    %152 = vrot.lane.b32.xlu0 %v64, 15
    %v153 = vpop.permute.xlu0 %152
    %vm154 = vcmp.lt.s32.totalorder %v74, 15
    %v155 = vsel %vm154, %v151, %v153
    %v156 = vsel %vm154, %v149, %v151
    %v157 = vsel %vm154, %v147, %v149
    %v158 = vsel %vm154, %v153, %v147
    %s159 = scalar_lea.vmem %s5, 8
    %v160 = vld [vmem:[%s159] sm:$0xf]
    %v162 = vlaneseq
    %v163 = vshrl.u32 %v162, 7
    %v164 = vsub.s32 0, %v163
    %v165 = vrot.slane %v160, %v164
    %v166 = vlaneseq
    %v167 = vshrl.u32 %v166, 7
    %v168 = vsub.s32 1, %v167
    %v169 = vrot.slane %v160, %v168
    %v170 = vlaneseq
    %v171 = vshrl.u32 %v170, 7
    %v172 = vsub.s32 2, %v171
    %v173 = vrot.slane %v160, %v172
    %v174 = vlaneseq
    %v175 = vshrl.u32 %v174, 7
    %v176 = vsub.s32 3, %v175
    %v177 = vrot.slane %v160, %v176
    %v182 = vmul.f32 %v158, %v165
    %v183 = vmul.f32 %v157, %v169
    %v184 = vmul.f32 %v156, %v173
    %v185 = vmul.f32 %v155, %v177
    %186 = vrot.lane.b32.xlu0 %v61, 1
    %v187 = vpop.permute.xlu0 %186
    %188 = vrot.lane.b32.xlu0 %v62, 1
    %v189 = vpop.permute.xlu0 %188
    %190 = vrot.lane.b32.xlu0 %v63, 1
    %v191 = vpop.permute.xlu0 %190
    %192 = vrot.lane.b32.xlu0 %v64, 1
    %v193 = vpop.permute.xlu0 %192
    %vm194 = vcmp.lt.s32.totalorder %v74, 1
    %v195 = vsel %vm194, %v191, %v193
    %v196 = vsel %vm194, %v189, %v191
    %v197 = vsel %vm194, %v187, %v189
    %v198 = vsel %vm194, %v193, %v187
    %s199 = scalar_lea.vmem %s5, 12
    %v200 = vld [vmem:[%s199] sm:$0xf]
    %v202 = vlaneseq
    %v203 = vshrl.u32 %v202, 7
    %v204 = vsub.s32 0, %v203
    %v205 = vrot.slane %v200, %v204
    %v206 = vlaneseq
    %v207 = vshrl.u32 %v206, 7
    %v208 = vsub.s32 1, %v207
    %v209 = vrot.slane %v200, %v208
    %v210 = vlaneseq
    %v211 = vshrl.u32 %v210, 7
    %v212 = vsub.s32 2, %v211
    %v213 = vrot.slane %v200, %v212
    %v214 = vlaneseq
    %v215 = vshrl.u32 %v214, 7
    %v216 = vsub.s32 3, %v215
    %v217 = vrot.slane %v200, %v216
    %v222 = vmul.f32 %v198, %v205
    %v223 = vmul.f32 %v197, %v209
    %v224 = vmul.f32 %v196, %v213
    %v225 = vmul.f32 %v195, %v217
    %226 = vrot.lane.b32.xlu0 %v61, 127
    %v227 = vpop.permute.xlu0 %226
    %228 = vrot.lane.b32.xlu0 %v62, 127
    %v229 = vpop.permute.xlu0 %228
    %230 = vrot.lane.b32.xlu0 %v63, 127
    %v231 = vpop.permute.xlu0 %230
    %232 = vrot.lane.b32.xlu0 %v64, 127
    %v233 = vpop.permute.xlu0 %232
    %vm234 = vcmp.lt.s32.totalorder %v74, 127
    %v235 = vsel %vm234, %v231, %v233
    %v236 = vsel %vm234, %v229, %v231
    %v237 = vsel %vm234, %v227, %v229
    %v238 = vsel %vm234, %v233, %v227
    %s239 = scalar_lea.vmem %s5, 20
    %v240 = vld [vmem:[%s239] sm:$0xf]
    %v242 = vlaneseq
    %v243 = vshrl.u32 %v242, 7
    %v244 = vsub.s32 0, %v243
    %v245 = vrot.slane %v240, %v244
    %v246 = vlaneseq
    %v247 = vshrl.u32 %v246, 7
    %v248 = vsub.s32 1, %v247
    %v249 = vrot.slane %v240, %v248
    %v250 = vlaneseq
    %v251 = vshrl.u32 %v250, 7
    %v252 = vsub.s32 2, %v251
    %v253 = vrot.slane %v240, %v252
    %v254 = vlaneseq
    %v255 = vshrl.u32 %v254, 7
    %v256 = vsub.s32 3, %v255
    %v257 = vrot.slane %v240, %v256
    %v262 = vmul.f32 %v237, %v245
    %v263 = vmul.f32 %v236, %v249
    %v264 = vmul.f32 %v235, %v253
    %v265 = vmul.f32 %v238, %v257
    %266 = vrot.lane.b32.xlu0 %v61, 113
    %v267 = vpop.permute.xlu0 %266
    %268 = vrot.lane.b32.xlu0 %v62, 113
    %v269 = vpop.permute.xlu0 %268
    %270 = vrot.lane.b32.xlu0 %v63, 113
    %v271 = vpop.permute.xlu0 %270
    %272 = vrot.lane.b32.xlu0 %v64, 113
    %v273 = vpop.permute.xlu0 %272
    %vm274 = vcmp.lt.s32.totalorder %v74, 113
    %v275 = vsel %vm274, %v271, %v273
    %v276 = vsel %vm274, %v269, %v271
    %v277 = vsel %vm274, %v267, %v269
    %v278 = vsel %vm274, %v273, %v267
    %s279 = scalar_lea.vmem %s5, 24
    %v280 = vld [vmem:[%s279] sm:$0xf]
    %v282 = vlaneseq
    %v283 = vshrl.u32 %v282, 7
    %v284 = vsub.s32 0, %v283
    %v285 = vrot.slane %v280, %v284
    %v286 = vlaneseq
    %v287 = vshrl.u32 %v286, 7
    %v288 = vsub.s32 1, %v287
    %v289 = vrot.slane %v280, %v288
    %v290 = vlaneseq
    %v291 = vshrl.u32 %v290, 7
    %v292 = vsub.s32 2, %v291
    %v293 = vrot.slane %v280, %v292
    %v294 = vlaneseq
    %v295 = vshrl.u32 %v294, 7
    %v296 = vsub.s32 3, %v295
    %v297 = vrot.slane %v280, %v296
    %v302 = vmul.f32 %v277, %v285
    %v303 = vmul.f32 %v276, %v289
    %v304 = vmul.f32 %v275, %v293
    %v305 = vmul.f32 %v278, %v297
    %306 = vrot.lane.b32.xlu0 %v61, 112
    %v307 = vpop.permute.xlu0 %306
    %308 = vrot.lane.b32.xlu0 %v62, 112
    %v309 = vpop.permute.xlu0 %308
    %310 = vrot.lane.b32.xlu0 %v63, 112
    %v311 = vpop.permute.xlu0 %310
    %312 = vrot.lane.b32.xlu0 %v64, 112
    %v313 = vpop.permute.xlu0 %312
    %vm314 = vcmp.lt.s32.totalorder %v74, 112
    %v315 = vsel %vm314, %v311, %v313
    %v316 = vsel %vm314, %v309, %v311
    %v317 = vsel %vm314, %v307, %v309
    %v318 = vsel %vm314, %v313, %v307
    %s319 = scalar_lea.vmem %s5, 28
    %v320 = vld [vmem:[%s319] sm:$0xf]
    %v322 = vlaneseq
    %v323 = vshrl.u32 %v322, 7
    %v324 = vsub.s32 0, %v323
    %v325 = vrot.slane %v320, %v324
    %v326 = vlaneseq
    %v327 = vshrl.u32 %v326, 7
    %v328 = vsub.s32 1, %v327
    %v329 = vrot.slane %v320, %v328
    %v330 = vlaneseq
    %v331 = vshrl.u32 %v330, 7
    %v332 = vsub.s32 2, %v331
    %v333 = vrot.slane %v320, %v332
    %v334 = vlaneseq
    %v335 = vshrl.u32 %v334, 7
    %v336 = vsub.s32 3, %v335
    %v337 = vrot.slane %v320, %v336
    %v342 = vmul.f32 %v317, %v325
    %v343 = vmul.f32 %v316, %v329
    %v344 = vmul.f32 %v315, %v333
    %v345 = vmul.f32 %v318, %v337
    %346 = vrot.lane.b32.xlu0 %v61, 111
    %v347 = vpop.permute.xlu0 %346
    %348 = vrot.lane.b32.xlu0 %v62, 111
    %v349 = vpop.permute.xlu0 %348
    %350 = vrot.lane.b32.xlu0 %v63, 111
    %v351 = vpop.permute.xlu0 %350
    %352 = vrot.lane.b32.xlu0 %v64, 111
    %v353 = vpop.permute.xlu0 %352
    %vm354 = vcmp.lt.s32.totalorder %v74, 111
    %v355 = vsel %vm354, %v351, %v353
    %v356 = vsel %vm354, %v349, %v351
    %v357 = vsel %vm354, %v347, %v349
    %v358 = vsel %vm354, %v353, %v347
    %s359 = scalar_lea.vmem %s5, 32
    %v360 = vld [vmem:[%s359] sm:$0xf]
    %v362 = vlaneseq
    %v363 = vshrl.u32 %v362, 7
    %v364 = vsub.s32 0, %v363
    %v365 = vrot.slane %v360, %v364
    %v366 = vlaneseq
    %v367 = vshrl.u32 %v366, 7
    %v368 = vsub.s32 1, %v367
    %v369 = vrot.slane %v360, %v368
    %v370 = vlaneseq
    %v371 = vshrl.u32 %v370, 7
    %v372 = vsub.s32 2, %v371
    %v373 = vrot.slane %v360, %v372
    %v374 = vlaneseq
    %v375 = vshrl.u32 %v374, 7
    %v376 = vsub.s32 3, %v375
    %v377 = vrot.slane %v360, %v376
    %v382 = vmul.f32 %v357, %v365
    %v383 = vmul.f32 %v356, %v369
    %v384 = vmul.f32 %v355, %v373
    %v385 = vmul.f32 %v358, %v377
    %v386 = vld [vmem:[#allocation5] sm:$0xff]
    %vm387 = vcmask 588800
    %v389 = vsel %vm387, %v386, 0
    %391 = vmatprep.subr.mxu0 %v103
    %392 = vmatpush1.msra.mxu0 %v102
    %393 = vmatprep.subr.mxu0 %v143
    %394 = vmatpush1.msra.mxu0 %v142
    %395 = vmatprep.subr.mxu0 %v183
    %396 = vmatpush1.msra.mxu0 %v182
    %397 = vmatprep.subr.mxu0 %v223
    %398 = vmatpush1.msra.mxu0 %v222
    %399 = vmatprep.subr.mxu0 %v62
    %400 = vmatpush1.msra.mxu0 %v61
    %401 = vmatprep.subr.mxu0 %v263
    %402 = vmatpush1.msra.mxu0 %v262
    %403 = vmatprep.subr.mxu0 %v303
    %404 = vmatpush1.msra.mxu0 %v302
    %405 = vmatprep.subr.mxu0 %v343
    %406 = vmatpush1.msra.mxu0 %v342
    %407 = vmatprep.subr.mxu0 %v383
    %408 = vmatpush1.msra.mxu0 %v382
    %409 = vmatprep.subr.mxu0 0.0
    %410 = vmatpush1.msra.mxu0 0.0
    %411 = vmatprep.subr.mxu0 0.0
    %412 = vmatpush1.msra.mxu0 0.0
    %413 = vmatprep.subr.mxu0 0.0
    %414 = vmatpush1.msra.mxu0 0.0
    %415 = vmatprep.subr.mxu0 0.0
    %416 = vmatpush1.msra.mxu0 0.0
    %417 = vmatprep.subr.mxu0 0.0
    %418 = vmatpush1.msra.mxu0 0.0
    %419 = vmatprep.subr.mxu0 0.0
    %420 = vmatpush1.msra.mxu0 0.0
    %421 = vmatprep.subr.mxu0 0.0
    %422 = vmatpush1.msra.mxu0 0.0
    %423 = vmatprep.subr.mxu0 0.0
    %424 = vmatpush1.msra.mxu0 0.0
    %425 = vmatprep.subr.mxu0 0.0
    %426 = vmatpush1.msra.mxu0 0.0
    %427 = vmatprep.subr.mxu0 0.0
    %428 = vmatpush1.msra.mxu0 0.0
    %429 = vmatprep.subr.mxu0 0.0
    %430 = vmatpush1.msra.mxu0 0.0
    %431 = vmatprep.subr.mxu0 0.0
    %432 = vmatpush1.msra.mxu0 0.0
    %433 = vmatprep.subr.mxu0 0.0
    %434 = vmatpush1.msra.mxu0 0.0
    %435 = vmatprep.subr.mxu0 0.0
    %436 = vmatpush1.msra.mxu0 0.0
    %437 = vmatprep.subr.mxu0 0.0
    %438 = vmatpush1.msra.mxu0 0.0
    %439 = vmatprep.subr.mxu0 0.0
    %440 = vmatpush1.msra.mxu0 0.0
    %441 = vmatprep.subr.mxu0 0.0
    %442 = vmatpush1.msra.mxu0 0.0
    %443 = vmatprep.subr.mxu0 0.0
    %444 = vmatpush1.msra.mxu0 0.0
    %445 = vmatprep.subr.mxu0 0.0
    %446 = vmatpush1.msra.mxu0 0.0
    %447 = vmatprep.subr.mxu0 0.0
    %448 = vmatpush1.msra.mxu0 0.0
    %449 = vmatprep.subr.mxu0 0.0
    %450 = vmatpush1.msra.mxu0 0.0
    %451 = vmatprep.subr.mxu0 0.0
    %452 = vmatpush1.msra.mxu0 0.0
    %453 = vmatprep.subr.mxu0 0.0
    %454 = vmatpush1.msra.mxu0 0.0
    %455 = vmatprep.mubr.f32.mxu0 0.0
    %456 = vmatmul.mubr.f32.gmra.mrb[0].mxu0 %v389
    %v457 = vpop.f32.mrb[0].mxu0
    %v458 = vadd.f32 0.0, %v457
    %v459 = vpop.f32.mrb[0].mxu0
    %v460 = vadd.f32 0.0, %v459
    %461 = vdwg.mxu0
    %462 = vmatprep.subr.mxu0 %v105
    %463 = vmatpush1.msra.mxu0 %v104
    %464 = vmatprep.subr.mxu0 %v145
    %465 = vmatpush1.msra.mxu0 %v144
    %466 = vmatprep.subr.mxu0 %v185
    %467 = vmatpush1.msra.mxu0 %v184
    %468 = vmatprep.subr.mxu0 %v225
    %469 = vmatpush1.msra.mxu0 %v224
    %470 = vmatprep.subr.mxu0 %v64
    %471 = vmatpush1.msra.mxu0 %v63
    %472 = vmatprep.subr.mxu0 %v265
    %473 = vmatpush1.msra.mxu0 %v264
    %474 = vmatprep.subr.mxu0 %v305
    %475 = vmatpush1.msra.mxu0 %v304
    %476 = vmatprep.subr.mxu0 %v345
    %477 = vmatpush1.msra.mxu0 %v344
    %478 = vmatprep.subr.mxu0 %v385
    %479 = vmatpush1.msra.mxu0 %v384
    %480 = vmatprep.subr.mxu0 0.0
    %481 = vmatpush1.msra.mxu0 0.0
    %482 = vmatprep.subr.mxu0 0.0
    %483 = vmatpush1.msra.mxu0 0.0
    %484 = vmatprep.subr.mxu0 0.0
    %485 = vmatpush1.msra.mxu0 0.0
    %486 = vmatprep.subr.mxu0 0.0
    %487 = vmatpush1.msra.mxu0 0.0
    %488 = vmatprep.subr.mxu0 0.0
    %489 = vmatpush1.msra.mxu0 0.0
    %490 = vmatprep.subr.mxu0 0.0
    %491 = vmatpush1.msra.mxu0 0.0
    %492 = vmatprep.subr.mxu0 0.0
    %493 = vmatpush1.msra.mxu0 0.0
    %494 = vmatprep.subr.mxu0 0.0
    %495 = vmatpush1.msra.mxu0 0.0
    %496 = vmatprep.subr.mxu0 0.0
    %497 = vmatpush1.msra.mxu0 0.0
    %498 = vmatprep.subr.mxu0 0.0
    %499 = vmatpush1.msra.mxu0 0.0
    %500 = vmatprep.subr.mxu0 0.0
    %501 = vmatpush1.msra.mxu0 0.0
    %502 = vmatprep.subr.mxu0 0.0
    %503 = vmatpush1.msra.mxu0 0.0
    %504 = vmatprep.subr.mxu0 0.0
    %505 = vmatpush1.msra.mxu0 0.0
    %506 = vmatprep.subr.mxu0 0.0
    %507 = vmatpush1.msra.mxu0 0.0
    %508 = vmatprep.subr.mxu0 0.0
    %509 = vmatpush1.msra.mxu0 0.0
    %510 = vmatprep.subr.mxu0 0.0
    %511 = vmatpush1.msra.mxu0 0.0
    %512 = vmatprep.subr.mxu0 0.0
    %513 = vmatpush1.msra.mxu0 0.0
    %514 = vmatprep.subr.mxu0 0.0
    %515 = vmatpush1.msra.mxu0 0.0
    %516 = vmatprep.subr.mxu0 0.0
    %517 = vmatpush1.msra.mxu0 0.0
    %518 = vmatprep.subr.mxu0 0.0
    %519 = vmatpush1.msra.mxu0 0.0
    %520 = vmatprep.subr.mxu0 0.0
    %521 = vmatpush1.msra.mxu0 0.0
    %522 = vmatprep.subr.mxu0 0.0
    %523 = vmatpush1.msra.mxu0 0.0
    %524 = vmatprep.subr.mxu0 0.0
    %525 = vmatpush1.msra.mxu0 0.0
    %526 = vmatprep.mubr.f32.mxu0 0.0
    %527 = vmatmul.mubr.f32.gmra.mrb[0].mxu0 %v389
    %v528 = vpop.f32.mrb[0].mxu0
    %v529 = vadd.f32 0.0, %v528
    %v530 = vpop.f32.mrb[0].mxu0
    %v531 = vadd.f32 0.0, %v530
    %532 = vdwg.mxu0
    %v533 = vmul.f32 %v458, %v458
    %v534 = vmul.f32 %v460, %v460
    %v535 = vmul.f32 %v529, %v529
    %v536 = vmul.f32 %v531, %v531
    %v537 = vadd.f32 %v458, %v460
    %538 = vadd.xlane.f32.xlu0 %v537
    %v539 = vpop.xlane.xlu0 %538
    %v540 = vadd.f32 %v533, %v534
    %541 = vadd.xlane.f32.xlu0 %v540
    %v542 = vpop.xlane.xlu0 %541
    %v543 = vadd.f32 %v529, %v531
    %544 = vadd.xlane.f32.xlu0 %v543
    %v545 = vpop.xlane.xlu0 %544
    %v546 = vadd.f32 %v535, %v536
    %547 = vadd.xlane.f32.xlu0 %v546
    %v548 = vpop.xlane.xlu0 %547
    %v549 = vmul.f32 %v539, 0.00390625
    %v550 = vmul.f32 %v542, 0.00390625
    %v551 = vmul.f32 %v545, 0.00390625
    %v552 = vmul.f32 %v548, 0.00390625
    %v553 = vmul.f32 %v549, %v549
    %v554 = vsub.f32 %v550, %v553
    %v555 = vsub.f32 %v458, %v549
    %v556 = vsub.f32 %v460, %v549
    %v557 = vadd.f32 %v554, 1e-05
    %v558 = vrsqrt.pop %v557
    %v559 = vmul.f32 %v555, %v558
    %v560 = vmul.f32 %v556, %v558
    %562 = vset.pattern.permute.xlu0 0
    %563 = vperm.xlu0 %562, %v59
    %v564 = vpop.permute.xlu0 %563
    %v566 = vmul.f32 %v559, %v564
    %v567 = vmul.f32 %v560, %v564
    %569 = vset.pattern.permute.xlu0 0
    %570 = vperm.xlu0 %569, %v60
    %v571 = vpop.permute.xlu0 %570
    %v573 = vadd.f32 %v566, %v571
    %v574 = vadd.f32 %v567, %v571
    %v575 = vmax.f32 %v573, 0.0
    %v576 = vmax.f32 %v574, 0.0
    %v577 = vmul.f32 %v551, %v551
    %v578 = vsub.f32 %v552, %v577
    %v579 = vsub.f32 %v529, %v551
    %v580 = vsub.f32 %v531, %v551
    %v581 = vadd.f32 %v578, 1e-05
    %v582 = vrsqrt.pop %v581
    %v583 = vmul.f32 %v579, %v582
    %v584 = vmul.f32 %v580, %v582
    %v585 = vmul.f32 %v583, %v564
    %v586 = vmul.f32 %v584, %v564
    %v587 = vadd.f32 %v585, %v571
    %v588 = vadd.f32 %v586, %v571
    %v589 = vmax.f32 %v587, 0.0
    %v590 = vmax.f32 %v588, 0.0
    %591 = vrot.lane.b32.xlu0 %v575, 17
    %v592 = vpop.permute.xlu0 %591
    %593 = vrot.lane.b32.xlu0 %v576, 17
    %v594 = vpop.permute.xlu0 %593
    %595 = vrot.lane.b32.xlu0 %v589, 17
    %v596 = vpop.permute.xlu0 %595
    %597 = vrot.lane.b32.xlu0 %v590, 17
    %v598 = vpop.permute.xlu0 %597
    %v599 = vsel %vm75, %v596, %v598
    %v600 = vsel %vm75, %v594, %v596
    %v601 = vsel %vm75, %v592, %v594
    %v602 = vsel %vm75, %v598, %v592
    %v603 = vmul.f32 %v602, %v85
    %v604 = vmul.f32 %v601, %v89
    %v605 = vmul.f32 %v600, %v93
    %v606 = vmul.f32 %v599, %v97
    %607 = vrot.lane.b32.xlu0 %v575, 16
    %v608 = vpop.permute.xlu0 %607
    %609 = vrot.lane.b32.xlu0 %v576, 16
    %v610 = vpop.permute.xlu0 %609
    %611 = vrot.lane.b32.xlu0 %v589, 16
    %v612 = vpop.permute.xlu0 %611
    %613 = vrot.lane.b32.xlu0 %v590, 16
    %v614 = vpop.permute.xlu0 %613
    %v615 = vsel %vm114, %v612, %v614
    %v616 = vsel %vm114, %v610, %v612
    %v617 = vsel %vm114, %v608, %v610
    %v618 = vsel %vm114, %v614, %v608
    %v619 = vmul.f32 %v618, %v125
    %v620 = vmul.f32 %v617, %v129
    %v621 = vmul.f32 %v616, %v133
    %v622 = vmul.f32 %v615, %v137
    %623 = vrot.lane.b32.xlu0 %v575, 15
    %v624 = vpop.permute.xlu0 %623
    %625 = vrot.lane.b32.xlu0 %v576, 15
    %v626 = vpop.permute.xlu0 %625
    %627 = vrot.lane.b32.xlu0 %v589, 15
    %v628 = vpop.permute.xlu0 %627
    %629 = vrot.lane.b32.xlu0 %v590, 15
    %v630 = vpop.permute.xlu0 %629
    %v631 = vsel %vm154, %v628, %v630
    %v632 = vsel %vm154, %v626, %v628
    %v633 = vsel %vm154, %v624, %v626
    %v634 = vsel %vm154, %v630, %v624
    %v635 = vmul.f32 %v634, %v165
    %v636 = vmul.f32 %v633, %v169
    %v637 = vmul.f32 %v632, %v173
    %v638 = vmul.f32 %v631, %v177
    %639 = vrot.lane.b32.xlu0 %v575, 1
    %v640 = vpop.permute.xlu0 %639
    %641 = vrot.lane.b32.xlu0 %v576, 1
    %v642 = vpop.permute.xlu0 %641
    %643 = vrot.lane.b32.xlu0 %v589, 1
    %v644 = vpop.permute.xlu0 %643
    %645 = vrot.lane.b32.xlu0 %v590, 1
    %v646 = vpop.permute.xlu0 %645
    %v647 = vsel %vm194, %v644, %v646
    %v648 = vsel %vm194, %v642, %v644
    %v649 = vsel %vm194, %v640, %v642
    %v650 = vsel %vm194, %v646, %v640
    %v651 = vmul.f32 %v650, %v205
    %v652 = vmul.f32 %v649, %v209
    %v653 = vmul.f32 %v648, %v213
    %v654 = vmul.f32 %v647, %v217
    %655 = vrot.lane.b32.xlu0 %v575, 127
    %v656 = vpop.permute.xlu0 %655
    %657 = vrot.lane.b32.xlu0 %v576, 127
    %v658 = vpop.permute.xlu0 %657
    %659 = vrot.lane.b32.xlu0 %v589, 127
    %v660 = vpop.permute.xlu0 %659
    %661 = vrot.lane.b32.xlu0 %v590, 127
    %v662 = vpop.permute.xlu0 %661
    %v663 = vsel %vm234, %v660, %v662
    %v664 = vsel %vm234, %v658, %v660
    %v665 = vsel %vm234, %v656, %v658
    %v666 = vsel %vm234, %v662, %v656
    %v667 = vmul.f32 %v665, %v245
    %v668 = vmul.f32 %v664, %v249
    %v669 = vmul.f32 %v663, %v253
    %v670 = vmul.f32 %v666, %v257
    %671 = vrot.lane.b32.xlu0 %v575, 113
    %v672 = vpop.permute.xlu0 %671
    %673 = vrot.lane.b32.xlu0 %v576, 113
    %v674 = vpop.permute.xlu0 %673
    %675 = vrot.lane.b32.xlu0 %v589, 113
    %v676 = vpop.permute.xlu0 %675
    %677 = vrot.lane.b32.xlu0 %v590, 113
    %v678 = vpop.permute.xlu0 %677
    %v679 = vsel %vm274, %v676, %v678
    %v680 = vsel %vm274, %v674, %v676
    %v681 = vsel %vm274, %v672, %v674
    %v682 = vsel %vm274, %v678, %v672
    %v683 = vmul.f32 %v681, %v285
    %v684 = vmul.f32 %v680, %v289
    %v685 = vmul.f32 %v679, %v293
    %v686 = vmul.f32 %v682, %v297
    %687 = vrot.lane.b32.xlu0 %v575, 112
    %v688 = vpop.permute.xlu0 %687
    %689 = vrot.lane.b32.xlu0 %v576, 112
    %v690 = vpop.permute.xlu0 %689
    %691 = vrot.lane.b32.xlu0 %v589, 112
    %v692 = vpop.permute.xlu0 %691
    %693 = vrot.lane.b32.xlu0 %v590, 112
    %v694 = vpop.permute.xlu0 %693
    %v695 = vsel %vm314, %v692, %v694
    %v696 = vsel %vm314, %v690, %v692
    %v697 = vsel %vm314, %v688, %v690
    %v698 = vsel %vm314, %v694, %v688
    %v699 = vmul.f32 %v697, %v325
    %v700 = vmul.f32 %v696, %v329
    %v701 = vmul.f32 %v695, %v333
    %v702 = vmul.f32 %v698, %v337
    %703 = vrot.lane.b32.xlu0 %v575, 111
    %v704 = vpop.permute.xlu0 %703
    %705 = vrot.lane.b32.xlu0 %v576, 111
    %v706 = vpop.permute.xlu0 %705
    %707 = vrot.lane.b32.xlu0 %v589, 111
    %v708 = vpop.permute.xlu0 %707
    %709 = vrot.lane.b32.xlu0 %v590, 111
    %v710 = vpop.permute.xlu0 %709
    %v711 = vsel %vm354, %v708, %v710
    %v712 = vsel %vm354, %v706, %v708
    %v713 = vsel %vm354, %v704, %v706
    %v714 = vsel %vm354, %v710, %v704
    %v715 = vmul.f32 %v713, %v365
    %v716 = vmul.f32 %v712, %v369
    %v717 = vmul.f32 %v711, %v373
    %v718 = vmul.f32 %v714, %v377
    %v719 = vld [vmem:[#allocation7] sm:$0xff]
    %v721 = vsel %vm387, %v719, 0
    %723 = vmatprep.subr.mxu0 %v604
    %724 = vmatpush1.msra.mxu0 %v603
    %725 = vmatprep.subr.mxu0 %v620
    %726 = vmatpush1.msra.mxu0 %v619
    %727 = vmatprep.subr.mxu0 %v636
    %728 = vmatpush1.msra.mxu0 %v635
    %729 = vmatprep.subr.mxu0 %v652
    %730 = vmatpush1.msra.mxu0 %v651
    %731 = vmatprep.subr.mxu0 %v576
    %732 = vmatpush1.msra.mxu0 %v575
    %733 = vmatprep.subr.mxu0 %v668
    %734 = vmatpush1.msra.mxu0 %v667
    %735 = vmatprep.subr.mxu0 %v684
    %736 = vmatpush1.msra.mxu0 %v683
    %737 = vmatprep.subr.mxu0 %v700
    %738 = vmatpush1.msra.mxu0 %v699
    %739 = vmatprep.subr.mxu0 %v716
    %740 = vmatpush1.msra.mxu0 %v715
    %741 = vmatprep.subr.mxu0 0.0
    %742 = vmatpush1.msra.mxu0 0.0
    %743 = vmatprep.subr.mxu0 0.0
    %744 = vmatpush1.msra.mxu0 0.0
    %745 = vmatprep.subr.mxu0 0.0
    %746 = vmatpush1.msra.mxu0 0.0
    %747 = vmatprep.subr.mxu0 0.0
    %748 = vmatpush1.msra.mxu0 0.0
    %749 = vmatprep.subr.mxu0 0.0
    %750 = vmatpush1.msra.mxu0 0.0
    %751 = vmatprep.subr.mxu0 0.0
    %752 = vmatpush1.msra.mxu0 0.0
    %753 = vmatprep.subr.mxu0 0.0
    %754 = vmatpush1.msra.mxu0 0.0
    %755 = vmatprep.subr.mxu0 0.0
    %756 = vmatpush1.msra.mxu0 0.0
    %757 = vmatprep.subr.mxu0 0.0
    %758 = vmatpush1.msra.mxu0 0.0
    %759 = vmatprep.subr.mxu0 0.0
    %760 = vmatpush1.msra.mxu0 0.0
    %761 = vmatprep.subr.mxu0 0.0
    %762 = vmatpush1.msra.mxu0 0.0
    %763 = vmatprep.subr.mxu0 0.0
    %764 = vmatpush1.msra.mxu0 0.0
    %765 = vmatprep.subr.mxu0 0.0
    %766 = vmatpush1.msra.mxu0 0.0
    %767 = vmatprep.subr.mxu0 0.0
    %768 = vmatpush1.msra.mxu0 0.0
    %769 = vmatprep.subr.mxu0 0.0
    %770 = vmatpush1.msra.mxu0 0.0
    %771 = vmatprep.subr.mxu0 0.0
    %772 = vmatpush1.msra.mxu0 0.0
    %773 = vmatprep.subr.mxu0 0.0
    %774 = vmatpush1.msra.mxu0 0.0
    %775 = vmatprep.subr.mxu0 0.0
    %776 = vmatpush1.msra.mxu0 0.0
    %777 = vmatprep.subr.mxu0 0.0
    %778 = vmatpush1.msra.mxu0 0.0
    %779 = vmatprep.subr.mxu0 0.0
    %780 = vmatpush1.msra.mxu0 0.0
    %781 = vmatprep.subr.mxu0 0.0
    %782 = vmatpush1.msra.mxu0 0.0
    %783 = vmatprep.subr.mxu0 0.0
    %784 = vmatpush1.msra.mxu0 0.0
    %785 = vmatprep.subr.mxu0 0.0
    %786 = vmatpush1.msra.mxu0 0.0
    %787 = vmatprep.mubr.f32.mxu0 0.0
    %788 = vmatmul.mubr.f32.gmra.mrb[0].mxu0 %v721
    %v789 = vpop.f32.mrb[0].mxu0
    %v790 = vadd.f32 0.0, %v789
    %v791 = vpop.f32.mrb[0].mxu0
    %v792 = vadd.f32 0.0, %v791
    %793 = vdwg.mxu0
    %794 = vmatprep.subr.mxu0 %v606
    %795 = vmatpush1.msra.mxu0 %v605
    %796 = vmatprep.subr.mxu0 %v622
    %797 = vmatpush1.msra.mxu0 %v621
    %798 = vmatprep.subr.mxu0 %v638
    %799 = vmatpush1.msra.mxu0 %v637
    %800 = vmatprep.subr.mxu0 %v654
    %801 = vmatpush1.msra.mxu0 %v653
    %802 = vmatprep.subr.mxu0 %v590
    %803 = vmatpush1.msra.mxu0 %v589
    %804 = vmatprep.subr.mxu0 %v670
    %805 = vmatpush1.msra.mxu0 %v669
    %806 = vmatprep.subr.mxu0 %v686
    %807 = vmatpush1.msra.mxu0 %v685
    %808 = vmatprep.subr.mxu0 %v702
    %809 = vmatpush1.msra.mxu0 %v701
    %810 = vmatprep.subr.mxu0 %v718
    %811 = vmatpush1.msra.mxu0 %v717
    %812 = vmatprep.subr.mxu0 0.0
    %813 = vmatpush1.msra.mxu0 0.0
    %814 = vmatprep.subr.mxu0 0.0
    %815 = vmatpush1.msra.mxu0 0.0
    %816 = vmatprep.subr.mxu0 0.0
    %817 = vmatpush1.msra.mxu0 0.0
    %818 = vmatprep.subr.mxu0 0.0
    %819 = vmatpush1.msra.mxu0 0.0
    %820 = vmatprep.subr.mxu0 0.0
    %821 = vmatpush1.msra.mxu0 0.0
    %822 = vmatprep.subr.mxu0 0.0
    %823 = vmatpush1.msra.mxu0 0.0
    %824 = vmatprep.subr.mxu0 0.0
    %825 = vmatpush1.msra.mxu0 0.0
    %826 = vmatprep.subr.mxu0 0.0
    %827 = vmatpush1.msra.mxu0 0.0
    %828 = vmatprep.subr.mxu0 0.0
    %829 = vmatpush1.msra.mxu0 0.0
    %830 = vmatprep.subr.mxu0 0.0
    %831 = vmatpush1.msra.mxu0 0.0
    %832 = vmatprep.subr.mxu0 0.0
    %833 = vmatpush1.msra.mxu0 0.0
    %834 = vmatprep.subr.mxu0 0.0
    %835 = vmatpush1.msra.mxu0 0.0
    %836 = vmatprep.subr.mxu0 0.0
    %837 = vmatpush1.msra.mxu0 0.0
    %838 = vmatprep.subr.mxu0 0.0
    %839 = vmatpush1.msra.mxu0 0.0
    %840 = vmatprep.subr.mxu0 0.0
    %841 = vmatpush1.msra.mxu0 0.0
    %842 = vmatprep.subr.mxu0 0.0
    %843 = vmatpush1.msra.mxu0 0.0
    %844 = vmatprep.subr.mxu0 0.0
    %845 = vmatpush1.msra.mxu0 0.0
    %846 = vmatprep.subr.mxu0 0.0
    %847 = vmatpush1.msra.mxu0 0.0
    %848 = vmatprep.subr.mxu0 0.0
    %849 = vmatpush1.msra.mxu0 0.0
    %850 = vmatprep.subr.mxu0 0.0
    %851 = vmatpush1.msra.mxu0 0.0
    %852 = vmatprep.subr.mxu0 0.0
    %853 = vmatpush1.msra.mxu0 0.0
    %854 = vmatprep.subr.mxu0 0.0
    %855 = vmatpush1.msra.mxu0 0.0
    %856 = vmatprep.subr.mxu0 0.0
    %857 = vmatpush1.msra.mxu0 0.0
    %858 = vmatprep.mubr.f32.mxu0 0.0
    %859 = vmatmul.mubr.f32.gmra.mrb[0].mxu0 %v721
    %v860 = vpop.f32.mrb[0].mxu0
    %v861 = vadd.f32 0.0, %v860
    %v862 = vpop.f32.mrb[0].mxu0
    %v863 = vadd.f32 0.0, %v862
    %864 = vdwg.mxu0
    %v865 = vmul.f32 %v790, %v790
    %v866 = vmul.f32 %v792, %v792
    %v867 = vmul.f32 %v861, %v861
    %v868 = vmul.f32 %v863, %v863
    %v869 = vadd.f32 %v790, %v792
    %870 = vadd.xlane.f32.xlu0 %v869
    %v871 = vpop.xlane.xlu0 %870
    %v872 = vadd.f32 %v865, %v866
    %873 = vadd.xlane.f32.xlu0 %v872
    %v874 = vpop.xlane.xlu0 %873
    %v875 = vadd.f32 %v861, %v863
    %876 = vadd.xlane.f32.xlu0 %v875
    %v877 = vpop.xlane.xlu0 %876
    %v878 = vadd.f32 %v867, %v868
    %879 = vadd.xlane.f32.xlu0 %v878
    %v880 = vpop.xlane.xlu0 %879
    %v881 = vmul.f32 %v871, 0.00390625
    %v882 = vmul.f32 %v874, 0.00390625
    %v883 = vmul.f32 %v877, 0.00390625
    %v884 = vmul.f32 %v880, 0.00390625
    %v885 = vmul.f32 %v881, %v881
    %v886 = vsub.f32 %v882, %v885
    %v887 = vsub.f32 %v790, %v881
    %v888 = vsub.f32 %v792, %v881
    %v889 = vadd.f32 %v886, 1e-05
    %v890 = vrsqrt.pop %v889
    %v891 = vmul.f32 %v887, %v890
    %v892 = vmul.f32 %v888, %v890
    %v893 = vmul.f32 %v891, %v564
    %v894 = vmul.f32 %v892, %v564
    %v895 = vadd.f32 %v893, %v571
    %v896 = vadd.f32 %v894, %v571
    %v897 = vmax.f32 %v895, 0.0
    %v898 = vmax.f32 %v896, 0.0
    %v899 = vmul.f32 %v883, %v883
    %v900 = vsub.f32 %v884, %v899
    %v901 = vsub.f32 %v861, %v883
    %v902 = vsub.f32 %v863, %v883
    %v903 = vadd.f32 %v900, 1e-05
    %v904 = vrsqrt.pop %v903
    %v905 = vmul.f32 %v901, %v904
    %v906 = vmul.f32 %v902, %v904
    %v907 = vmul.f32 %v905, %v564
    %v908 = vmul.f32 %v906, %v564
    %v909 = vadd.f32 %v907, %v571
    %v910 = vadd.f32 %v908, %v571
    %v911 = vmax.f32 %v909, 0.0
    %v912 = vmax.f32 %v910, 0.0
    %913 = vst [vmem:[#allocation8] sm:$0xff] %v897
    %914 = vst [vmem:[#allocation8 + $0x8] sm:$0xff] %v898
    %915 = vst [vmem:[#allocation8 + $0x10] sm:$0xff] %v911
    %916 = vst [vmem:[#allocation8 + $0x18] sm:$0xff] %v912
    // Predicated region
    $region38: #{tpu_custom_call.1} parent=1 // pred_check
      _
    $region39: #{tpu_custom_call.1} parent=1 // pred_check_branch
      %918 = sbr.rel (0) target = $region41
    $region40: #{tpu_custom_call.1} parent=1 // pred_region
      %s920 = ssub.s32 512, 512
      %921 = vsyncadd [#allocation4], %s920
      %s923 = sshll.u32 [#allocation8], 4
      %s924 = int_to_ptr.vmem [resolvable:$true] %s923
      %926 = dma.vmem_to_hbm [thread:$0]  %s924, 512, %s6, [#allocation4]
    $region41: #{tpu_custom_call.1} parent=1 // pred_fallthru
      _
    // Predicated region
    $region42: #{tpu_custom_call.1} parent=1 // pred_check
      _
    $region43: #{tpu_custom_call.1} parent=1 // pred_check_branch
      %928 = sbr.rel (0) target = $region45
    $region44: #{tpu_custom_call.1} parent=1 // pred_region
      %929 = dma.done [#allocation4], 512
    $region45: #{tpu_custom_call.1} parent=1 // pred_fallthru
      _
    %930 = vsyncpa [#allocation3], 1
    %931 = vsyncpa [#allocation6], 1
    %932 = vsyncpa [#allocation4], 1

</llo_original>
